<compile_context>
chip_gen: v7x
topology: tpu7x:2x2x1
jax: 0.10.0
libtpu: 0.0.40
codegen_flags: <defaults>
</compile_context>

<pallas_src>
import functools

import jax
import jax.numpy as jnp
from jax.experimental import pallas as pl
from jax.experimental.pallas import tpu as pltpu

BN_EPS = 1e-5


def _round_up(x, m):
    return (x + m - 1) // m * m


# ----------------------------------------------------------------------------
# Kernels
# ----------------------------------------------------------------------------
def _mlnet_embed_kernel(x_ref, w_ext_ref, b_ref, w_fc_ref, pred_ref, embed_ref):
    """Fused (BN-folded) extractor fc -> embedding -> classifier fc."""
    # x: (TN, Din) f32 in HBM -> cast to bf16 per-tile in VMEM (saves a
    # wrapper-side cast pass over the whole input).
    x = x_ref[...].astype(w_ext_ref.dtype)
    h = jnp.dot(x, w_ext_ref[...], preferred_element_type=jnp.float32)  # MXU
    h = h + b_ref[...]                                                   # VPU
    embed_ref[...] = h.astype(embed_ref.dtype)                           # bf16 store
    pred_ref[...] = jnp.dot(h.astype(w_fc_ref.dtype), w_fc_ref[...],
                            preferred_element_type=jnp.float32
                            ).astype(pred_ref.dtype)


def _mlnet_pred_kernel(x_ref, w_ref, b_ref, pred_ref):
    """Collapsed head for embed=False: single matmul + bias."""
    x = x_ref[...].astype(w_ref.dtype)
    pred_ref[...] = (jnp.dot(x, w_ref[...], preferred_element_type=jnp.float32)
                     + b_ref[...]).astype(pred_ref.dtype)


def _mlnet_classify_kernel(x_ref, w_ref, b_ref, idx_ref, *, n_classes):
    """classify(): fused collapsed head + argmax -> int32 index per row."""
    x = x_ref[...].astype(w_ref.dtype)
    logits = jnp.dot(x, w_ref[...], preferred_element_type=jnp.float32)
    logits = logits + b_ref[...]
    tn, c_pad = logits.shape
    col = jax.lax.broadcasted_iota(jnp.int32, (tn, c_pad), 1)
    # Mask the zero-padded class columns so they can never win the argmax.
    logits = jnp.where(col < n_classes, logits, jnp.float32(-jnp.inf))
    m = jnp.max(logits, axis=1, keepdims=True)
    # First index attaining the max (matches jnp.argmax semantics).
    idx = jnp.min(jnp.where(logits == m, col, c_pad), axis=1, keepdims=True)
    idx_ref[...] = idx.astype(jnp.int32)


# ----------------------------------------------------------------------------
# One-time parameter preparation (BN folding, padding, transpose, bf16 cast)
# ----------------------------------------------------------------------------
def prepare_mlnet_params(params, compute_dtype=jnp.bfloat16):
    """Fold eval-mode BN into the extractor fc and pre-pad / cast weights."""
    w_ext = params["w_ext"].astype(jnp.float32)      # (F, Din)  PyTorch layout
    b_ext = params["b_ext"].astype(jnp.float32)      # (F,)
    gamma = params["bn_gamma"].astype(jnp.float32)   # (F,)
    beta = params["bn_beta"].astype(jnp.float32)     # (F,)
    mean = params["bn_mean"].astype(jnp.float32)     # (F,)
    var = params["bn_var"].astype(jnp.float32)       # (F,)
    w_fc = params["w_fc"].astype(jnp.float32)        # (C, F)

    F_dim, Din = w_ext.shape
    C = w_fc.shape[0]
    F_pad = _round_up(F_dim, 128)
    C_pad = _round_up(C, 128)

    # Eval-mode BN folded into the linear layer (exact for running stats):
    #   bn(xW^T + b) = x (W^T * s) + (b - mean) * s + beta,  s = gamma*rsqrt(var+eps)
    scale = gamma * jax.lax.rsqrt(var + BN_EPS)               # (F,)
    w_fold = w_ext.T * scale[None, :]                         # (Din, F)
    b_fold = (b_ext - mean) * scale + beta                    # (F,)

    # Zero-pad to lane-dense shapes (padding columns are exactly zero).
    w_fold_p = jnp.zeros((Din, F_pad), jnp.float32).at[:, :F_dim].set(w_fold)
    b_fold_p = jnp.zeros((1, F_pad), jnp.float32).at[:, :F_dim].set(b_fold)
    w_fc_p = jnp.zeros((F_pad, C_pad), jnp.float32).at[:F_dim, :C].set(w_fc.T)

    # Collapsed head for the embed=False / classify path.
    w_full = w_fold_p @ w_fc_p                                # (Din, C_pad)
    b_full = b_fold_p @ w_fc_p                                # (1, C_pad)

    return {
        "Din": Din, "F": F_dim, "C": C, "F_pad": F_pad, "C_pad": C_pad,
        "compute_dtype": compute_dtype,
        "w_fold": w_fold_p.astype(compute_dtype),
        "b_fold": b_fold_p,                                   # f32 bias
        "w_fc": w_fc_p.astype(compute_dtype),
        "w_full": w_full.astype(compute_dtype),
        "b_full": b_full,                                     # f32 bias
    }


# ----------------------------------------------------------------------------
# Tiling helper
# ----------------------------------------------------------------------------
def _batch_tile(N, batch_tile):
    """Batch tile: multiple of 16 (bf16 sublanes), capped at 2048 so the
    double-buffered footprint stays under every generation's default scoped
    VMEM limit.  Force >= 2 grid steps when the batch is big enough so the
    ("parallel",) grid axis can shard across both v7x TensorCores."""
    TN = min(batch_tile, 2048, _round_up(N, 16))
    if N >= 32 and pl.cdiv(N, TN) < 2:
        TN = _round_up(pl.cdiv(N, 2), 16)
    return TN


# ----------------------------------------------------------------------------
# Forward
# ----------------------------------------------------------------------------
def mlnet_forward(x_feat, prep, embed=False, batch_tile=1024, trim=True):
    """x_feat: (N, 512) pooled resnet features, f32 (cast to bf16 in-kernel).

    trim=True slices off the zero class/feature padding columns; pass
    trim=False if the consumer tolerates 128-padded arrays (saves an XLA
    copy pass per output)."""
    N, Din = x_feat.shape
    assert Din == prep["Din"]
    F_dim, C = prep["F"], prep["C"]
    F_pad, C_pad = prep["F_pad"], prep["C_pad"]
    cdt = prep["compute_dtype"]
    out_dt = cdt  # bf16 outputs: f32 accumulation, cast at the store

    TN = _batch_tile(N, batch_tile)
    grid = (pl.cdiv(N, TN),)
    itm = jnp.dtype(cdt).itemsize
    cparams = pltpu.CompilerParams(dimension_semantics=("parallel",))

    if embed:
        cost = pl.CostEstimate(
            flops=2 * N * Din * F_pad + 2 * N * F_pad * C_pad,
            transcendentals=0,
            bytes_accessed=int(N * Din * 4
                               + Din * F_pad * itm + F_pad * 4
                               + F_pad * C_pad * itm
                               + N * C_pad * itm + N * F_pad * itm))
        pred, emb = pl.pallas_call(
            _mlnet_embed_kernel,
            out_shape=(jax.ShapeDtypeStruct((N, C_pad), out_dt),
                       jax.ShapeDtypeStruct((N, F_pad), out_dt)),
            grid=grid,
            in_specs=[
                pl.BlockSpec((TN, Din), lambda i: (i, 0)),        # x tile (f32)
                pl.BlockSpec((Din, F_pad), lambda i: (0, 0)),     # resident W1
                pl.BlockSpec((1, F_pad), lambda i: (0, 0)),       # resident b1
                pl.BlockSpec((F_pad, C_pad), lambda i: (0, 0)),   # resident W2
            ],
            out_specs=(pl.BlockSpec((TN, C_pad), lambda i: (i, 0)),
                       pl.BlockSpec((TN, F_pad), lambda i: (i, 0))),
            compiler_params=cparams,
            cost_estimate=cost,
        )(x_feat, prep["w_fold"], prep["b_fold"], prep["w_fc"])
        if trim:
            return pred[:, :C], emb[:, :F_dim]
        return pred, emb

    # embed=False: collapsed single-matmul head, no embedding writeback.
    cost = pl.CostEstimate(
        flops=2 * N * Din * C_pad,
        transcendentals=0,
        bytes_accessed=int(N * Din * 4 + Din * C_pad * itm
                           + C_pad * 4 + N * C_pad * itm))
    pred = pl.pallas_call(
        _mlnet_pred_kernel,
        out_shape=jax.ShapeDtypeStruct((N, C_pad), out_dt),
        grid=grid,
        in_specs=[
            pl.BlockSpec((TN, Din), lambda i: (i, 0)),            # x tile (f32)
            pl.BlockSpec((Din, C_pad), lambda i: (0, 0)),         # resident W
            pl.BlockSpec((1, C_pad), lambda i: (0, 0)),           # resident b
        ],
        out_specs=pl.BlockSpec((TN, C_pad), lambda i: (i, 0)),
        compiler_params=cparams,
        cost_estimate=cost,
    )(x_feat, prep["w_full"], prep["b_full"])
    if trim:
        return pred[:, :C]
    return pred


def mlnet_classify(x_feat, prep, batch_tile=1024):
    """MLNet.classify(): fused head + argmax -> (N,) int32 class indices."""
    N, Din = x_feat.shape
    assert Din == prep["Din"]
    C, C_pad = prep["C"], prep["C_pad"]
    cdt = prep["compute_dtype"]

    TN = _batch_tile(N, batch_tile)
    grid = (pl.cdiv(N, TN),)
    itm = jnp.dtype(cdt).itemsize
    cost = pl.CostEstimate(
        flops=2 * N * Din * C_pad,
        transcendentals=0,
        bytes_accessed=int(N * Din * 4 + Din * C_pad * itm + C_pad * 4 + N * 4))

    idx = pl.pallas_call(
        functools.partial(_mlnet_classify_kernel, n_classes=C),
        out_shape=jax.ShapeDtypeStruct((N, 1), jnp.int32),
        grid=grid,
        in_specs=[
            pl.BlockSpec((TN, Din), lambda i: (i, 0)),            # x tile (f32)
            pl.BlockSpec((Din, C_pad), lambda i: (0, 0)),         # resident W
            pl.BlockSpec((1, C_pad), lambda i: (0, 0)),           # resident b
        ],
        out_specs=pl.BlockSpec((TN, 1), lambda i: (i, 0)),
        compiler_params=pltpu.CompilerParams(
            dimension_semantics=("parallel",)),
        cost_estimate=cost,
    )(x_feat, prep["w_full"], prep["b_full"])
    return idx[:, 0]


# ----------------------------------------------------------------------------
# Pure-JAX reference (PyTorch semantics, f32)
# ----------------------------------------------------------------------------
def mlnet_forward_ref(x_feat, params):
    h = x_feat @ params["w_ext"].T + params["b_ext"]
    h_bn = ((h - params["bn_mean"]) / jnp.sqrt(params["bn_var"] + BN_EPS)
            * params["bn_gamma"] + params["bn_beta"])
    pred = h_bn @ params["w_fc"].T
    return pred, h_bn


# ----------------------------------------------------------------------------
if __name__ == "__main__":
    # Small, deterministic shapes consistent with the module:
    # resnet18 fc in_features = 512, feature_size = 64, n_classes = 16.
    N, Din, FEAT, NCLS = 8, 512, 64, 16

    key = jax.random.PRNGKey(0)
    ks = jax.random.split(key, 8)

    x_feat = jax.random.normal(ks[0], (N, Din), jnp.float32)

    params = {
        # feature_extractor.fc = Linear(512, feature_size)
        "w_ext": jax.random.normal(ks[1], (FEAT, Din), jnp.float32)
                 * (1.0 / jnp.sqrt(Din)),
        "b_ext": 0.01 * jax.random.normal(ks[2], (FEAT,), jnp.float32),
        # bn = BatchNorm1d(feature_size) — affine params + running stats
        "bn_gamma": 1.0 + 0.1 * jax.random.normal(ks[3], (FEAT,), jnp.float32),
        "bn_beta": 0.1 * jax.random.normal(ks[4], (FEAT,), jnp.float32),
        "bn_mean": 0.1 * jax.random.normal(ks[5], (FEAT,), jnp.float32),
        "bn_var": jnp.abs(jax.random.normal(ks[6], (FEAT,), jnp.float32)) + 0.5,
        # self.fc = Linear(feature_size, n_classes, bias=False)
        "w_fc": jax.random.normal(ks[7], (NCLS, FEAT), jnp.float32)
                * (1.0 / jnp.sqrt(FEAT)),
    }

    # One-time param prep (BN folding, padding, bf16 cast) — hoisted out of
    # the per-call path.
    prep = prepare_mlnet_params(params)

    # embed=True path: (pred, embeddings)
    pred, emb = mlnet_forward(x_feat, prep, embed=True)
    jax.block_until_ready((pred, emb))

    # embed=False path: collapsed single-matmul head
    pred_only = mlnet_forward(x_feat, prep, embed=False)
    jax.block_until_ready(pred_only)

    # classify(): fused head + masked argmax in-kernel
    cls_idx = jax.block_until_ready(mlnet_classify(x_feat, prep))

    pred_ref, emb_ref = mlnet_forward_ref(x_feat, params)
    assert pred.shape == (N, NCLS) and emb.shape == (N, FEAT)
    assert pred_only.shape == (N, NCLS)
    assert cls_idx.shape == (N,) and cls_idx.dtype == jnp.int32

    # bf16 inputs/weights/outputs with f32 accumulation: bf16-level tolerance.
    assert jnp.allclose(emb.astype(jnp.float32), emb_ref, atol=8e-2, rtol=8e-2)
    assert jnp.allclose(pred.astype(jnp.float32), pred_ref, atol=8e-2, rtol=8e-2)
    assert jnp.allclose(pred_only.astype(jnp.float32), pred_ref,
                        atol=8e-2, rtol=8e-2)

    # classify must match the f32 reference argmax except where the top-2
    # reference logits are within bf16 noise of each other.
    ref_idx = jnp.argmax(pred_ref, axis=1)
    top2 = jnp.sort(pred_ref, axis=1)[:, -2:]
    gap = top2[:, 1] - top2[:, 0]
    assert bool(jnp.all((cls_idx == ref_idx) | (gap < 5e-2)))

    print("KERNEL_OK")
</pallas_src>

<mosaic_0001>
module attributes {stable_mosaic.version = 11 : i64} {
  func.func @_mlnet_embed_kernel(%arg0: i32, %arg1: memref<16x512xf32, #tpu.memory_space<vmem>>, %arg2: memref<512x128xbf16, #tpu.memory_space<vmem>>, %arg3: memref<1x128xf32, #tpu.memory_space<vmem>>, %arg4: memref<128x128xbf16, #tpu.memory_space<vmem>>, %arg5: memref<16x128xbf16, #tpu.memory_space<vmem>>, %arg6: memref<16x128xbf16, #tpu.memory_space<vmem>>) attributes {dimension_semantics = [#tpu.dimension_semantics<parallel>], iteration_bounds = array<i64: 1>, scalar_prefetch = 0 : i64, scratch_operands = 0 : i64, tpu.core_type = #tpu.core_type<tc>, window_params = [{transform_indices = @transform_0, window_bounds = array<i64: 16, 512>}, {pipeline_mode = #tpu.pipeline_mode<synchronous>, transform_indices = @transform_1, window_bounds = array<i64: 512, 128>}, {pipeline_mode = #tpu.pipeline_mode<synchronous>, transform_indices = @transform_2, window_bounds = array<i64: 1, 128>}, {pipeline_mode = #tpu.pipeline_mode<synchronous>, transform_indices = @transform_3, window_bounds = array<i64: 128, 128>}, {transform_indices = @transform_4, window_bounds = array<i64: 16, 128>}, {transform_indices = @transform_5, window_bounds = array<i64: 16, 128>}]} {
    %c0 = arith.constant 0 : index
    %c0_0 = arith.constant 0 : index
    %0 = vector.load %arg1[%c0, %c0_0] : memref<16x512xf32, #tpu.memory_space<vmem>>, vector<16x512xf32>
    %1 = arith.truncf %0 : vector<16x512xf32> to vector<16x512xbf16>
    %c0_1 = arith.constant 0 : index
    %c0_2 = arith.constant 0 : index
    %2 = vector.load %arg2[%c0_1, %c0_2] : memref<512x128xbf16, #tpu.memory_space<vmem>>, vector<512x128xbf16>
    %cst = arith.constant dense<0.000000e+00> : vector<16x128xf32>
    %3 = tpu.matmul %1, %2, %cst {dimension_numbers = #tpu.dot_dimension_numbers<[1], [0], [0], [1], [0, 0, 1, 1], [], []>} : vector<16x512xbf16>, vector<512x128xbf16>, vector<16x128xf32> -> vector<16x128xf32>
    %c0_3 = arith.constant 0 : index
    %c0_4 = arith.constant 0 : index
    %4 = vector.load %arg3[%c0_3, %c0_4] : memref<1x128xf32, #tpu.memory_space<vmem>>, vector<1x128xf32>
    %5 = vector.broadcast %4 : vector<1x128xf32> to vector<16x128xf32>
    %6 = arith.addf %3, %5 : vector<16x128xf32>
    %7 = arith.truncf %6 : vector<16x128xf32> to vector<16x128xbf16>
    %c0_5 = arith.constant 0 : index
    %c0_6 = arith.constant 0 : index
    %8 = vector.load %arg6[%c0_5, %c0_6] : memref<16x128xbf16, #tpu.memory_space<vmem>>, vector<16x128xbf16>
    tpu.vector_store %arg6[%c0_5, %c0_6], %7 {strides = array<i32>} : memref<16x128xbf16, #tpu.memory_space<vmem>>, vector<16x128xbf16>,
    %9 = arith.truncf %6 : vector<16x128xf32> to vector<16x128xbf16>
    %c0_7 = arith.constant 0 : index
    %c0_8 = arith.constant 0 : index
    %10 = vector.load %arg4[%c0_7, %c0_8] : memref<128x128xbf16, #tpu.memory_space<vmem>>, vector<128x128xbf16>
    %cst_9 = arith.constant dense<0.000000e+00> : vector<16x128xf32>
    %11 = tpu.matmul %9, %10, %cst_9 {dimension_numbers = #tpu.dot_dimension_numbers<[1], [0], [0], [1], [0, 0, 1, 1], [], []>} : vector<16x128xbf16>, vector<128x128xbf16>, vector<16x128xf32> -> vector<16x128xf32>
    %12 = arith.truncf %11 : vector<16x128xf32> to vector<16x128xbf16>
    %c0_10 = arith.constant 0 : index
    %c0_11 = arith.constant 0 : index
    %13 = vector.load %arg5[%c0_10, %c0_11] : memref<16x128xbf16, #tpu.memory_space<vmem>>, vector<16x128xbf16>
    tpu.vector_store %arg5[%c0_10, %c0_11], %12 {strides = array<i32>} : memref<16x128xbf16, #tpu.memory_space<vmem>>, vector<16x128xbf16>,
    return
  }
  func.func @transform_0(%arg0: i32) -> (i32, i32) {
    %c0_i32 = arith.constant 0 : i32
    %c0_i32_0 = arith.constant 0 : i32
    return %arg0, %c0_i32 : i32, i32
  }
  func.func @transform_1(%arg0: i32) -> (i32, i32) {
    %c0_i32 = arith.constant 0 : i32
    %c0_i32_0 = arith.constant 0 : i32
    %c0_i32_1 = arith.constant 0 : i32
    return %c0_i32, %c0_i32_0 : i32, i32
  }
  func.func @transform_2(%arg0: i32) -> (i32, i32) {
    %c0_i32 = arith.constant 0 : i32
    %c0_i32_0 = arith.constant 0 : i32
    %c0_i32_1 = arith.constant 0 : i32
    return %c0_i32, %c0_i32_0 : i32, i32
  }
  func.func @transform_3(%arg0: i32) -> (i32, i32) {
    %c0_i32 = arith.constant 0 : i32
    %c0_i32_0 = arith.constant 0 : i32
    %c0_i32_1 = arith.constant 0 : i32
    return %c0_i32, %c0_i32_0 : i32, i32
  }
  func.func @transform_4(%arg0: i32) -> (i32, i32) {
    %c0_i32 = arith.constant 0 : i32
    %c0_i32_0 = arith.constant 0 : i32
    return %arg0, %c0_i32 : i32, i32
  }
  func.func @transform_5(%arg0: i32) -> (i32, i32) {
    %c0_i32 = arith.constant 0 : i32
    %c0_i32_0 = arith.constant 0 : i32
    return %arg0, %c0_i32 : i32, i32
  }
}

</mosaic_0001>

<llo_original>
// kernel: tpu_custom_call.1
$region0: #{tpu_custom_call.1}
  #allocation0 [shape = 'u32[]', space=smem, size = 0x4, offset = 0x4, fixed_abs, tag = 'smem constant byte address 0x4 - core index']
  #allocation1 [shape = 'u32[144,128]{1,0:T(1,128)}', space=vmem, size = 0x12000, scoped, tag = 'internal scratch']
  %s0 = inlined_call_operand.hbm [shape: f32[8,512], index: 0, kind: input, shape index: {}]
  %s1 = inlined_call_operand.hbm [shape: bf16[512,128], index: 1, kind: input, shape index: {}]
  %s2 = inlined_call_operand.vmem [shape: f32[1,128], index: 2, kind: input, shape index: {}]
  %s3 = inlined_call_operand.hbm [shape: bf16[128,128], index: 3, kind: input, shape index: {}]
  %s4 = inlined_call_operand.hbm [shape: bf16[8,128], index: 4, kind: output, shape index: {0}]
  %s5 = inlined_call_operand.hbm [shape: bf16[8,128], index: 5, kind: output, shape index: {1}]
  %6 = xla_tuple %s4, %s5
  %s7 = sld [smem:[#allocation0]]
  $region46: #{tpu_custom_call.1} parent=0
    _
  %s9 = ssub.s32 1, %s7
  %s10 = scalar_select 0, %s9, %s7
  $region1: #{tpu_custom_call.1} parent=0
    #allocation2 [shape = 'u8[32768]{0}', space=vmem, size = 0x8000, scoped, tag = 'input window, operand 0, single buffered']
    #allocation3 [shape = 's32[1]{0}', space=sflag, size = 0x4, scoped, tag = 'scoped memory for tpu_custom_call.1']
    #allocation4 [shape = 's32[1]{0}', space=sflag, size = 0x4, scoped, tag = 'scoped memory for tpu_custom_call.1']
    #allocation5 [shape = 'u8[131072]{0}', space=vmem, size = 0x20000, scoped, tag = 'input window, operand 1, single buffered']
    #allocation6 [shape = 's32[1]{0}', space=sflag, size = 0x4, scoped, tag = 'scoped memory for tpu_custom_call.1']
    #allocation7 [shape = 'u8[32768]{0}', space=vmem, size = 0x8000, scoped, tag = 'input window, operand 3, single buffered']
    #allocation8 [shape = 'u8[4096]{0}', space=vmem, size = 0x1000, scoped, tag = 'output window, operand 0, single buffered']
    #allocation9 [shape = 'u8[4096]{0}', space=vmem, size = 0x1000, scoped, tag = 'output window, operand 1, single buffered']
    #allocation10 [shape = 's32[1]{0}', space=sflag, size = 0x4, scoped, tag = 'scoped memory for tpu_custom_call.1']
    %11 = vsyncpa [#allocation3], 0
    %12 = vsyncpa [#allocation6], 0
    %13 = vsyncpa [#allocation4], 0
    %14 = vsyncpa [#allocation10], 0
    // Predicated region
    $region2: #{tpu_custom_call.1} parent=1 // pred_check
      _
    $region3: #{tpu_custom_call.1} parent=1 // pred_check_branch
      %16 = sbr.rel (0) target = $region5
    $region4: #{tpu_custom_call.1} parent=1 // pred_region
      %s18 = ssub.s32 1024, 512
      %19 = vsyncadd [#allocation3], %s18
      %s20 = sshll.u32 [#allocation2], 4
      %s21 = int_to_ptr.vmem [resolvable:$true] %s20
      %26 = dma.hbm_to_vmem [thread:$0]  %s0, 512, %s21, [#allocation3], 512, 512, 32
    $region5: #{tpu_custom_call.1} parent=1 // pred_fallthru
      _
    // Predicated region
    $region6: #{tpu_custom_call.1} parent=1 // pred_check
      _
    $region7: #{tpu_custom_call.1} parent=1 // pred_check_branch
      %28 = sbr.rel (0) target = $region9
    $region8: #{tpu_custom_call.1} parent=1 // pred_region
      %s30 = ssub.s32 4096, 4096
      %31 = vsyncadd [#allocation6], %s30
      %s32 = sshll.u32 [#allocation5], 4
      %s33 = int_to_ptr.vmem [resolvable:$true] %s32
      %38 = dma.hbm_to_vmem [thread:$0]  %s1, 4096, %s33, [#allocation6], 64, 64, 4
    $region9: #{tpu_custom_call.1} parent=1 // pred_fallthru
      _
    // Predicated region
    $region10: #{tpu_custom_call.1} parent=1 // pred_check
      _
    $region11: #{tpu_custom_call.1} parent=1 // pred_check_branch
      %40 = sbr.rel (0) target = $region13
    $region12: #{tpu_custom_call.1} parent=1 // pred_region
      _
    $region13: #{tpu_custom_call.1} parent=1 // pred_fallthru
      _
    // Predicated region
    $region14: #{tpu_custom_call.1} parent=1 // pred_check
      _
    $region15: #{tpu_custom_call.1} parent=1 // pred_check_branch
      %42 = sbr.rel (0) target = $region17
    $region16: #{tpu_custom_call.1} parent=1 // pred_region
      %s44 = ssub.s32 1024, 1024
      %45 = vsyncadd [#allocation6], %s44
      %s46 = sshll.u32 [#allocation7], 4
      %s47 = int_to_ptr.vmem [resolvable:$true] %s46
      %52 = dma.hbm_to_vmem [thread:$0]  %s3, 1024, %s47, [#allocation6], 64, 64, 4
    $region17: #{tpu_custom_call.1} parent=1 // pred_fallthru
      _
    // Predicated region
    $region18: #{tpu_custom_call.1} parent=1 // pred_check
      _
    $region19: #{tpu_custom_call.1} parent=1 // pred_check_branch
      %54 = sbr.rel (0) target = $region21
    $region20: #{tpu_custom_call.1} parent=1 // pred_region
      %55 = dma.done [#allocation3], 1024
    $region21: #{tpu_custom_call.1} parent=1 // pred_fallthru
      _
    // Predicated region
    $region22: #{tpu_custom_call.1} parent=1 // pred_check
      _
    $region23: #{tpu_custom_call.1} parent=1 // pred_check_branch
      %57 = sbr.rel (0) target = $region25
    $region24: #{tpu_custom_call.1} parent=1 // pred_region
      %58 = dma.done [#allocation6], 4096
    $region25: #{tpu_custom_call.1} parent=1 // pred_fallthru
      _
    // Predicated region
    $region26: #{tpu_custom_call.1} parent=1 // pred_check
      _
    $region27: #{tpu_custom_call.1} parent=1 // pred_check_branch
      %60 = sbr.rel (0) target = $region29
    $region28: #{tpu_custom_call.1} parent=1 // pred_region
      %61 = dma.done [#allocation6], 1024
    $region29: #{tpu_custom_call.1} parent=1 // pred_fallthru
      _
    %v63 = vld [vmem:[#allocation2] sm:$0xff]
    %v64 = vld [vmem:[#allocation2 + $0x8] sm:$0xff]
    %v65 = vld [vmem:[#allocation2 + $0x10] sm:$0xff]
    %v66 = vld [vmem:[#allocation2 + $0x18] sm:$0xff]
    %v67 = vld [vmem:[#allocation2 + $0x20] sm:$0xff]
    %v68 = vld [vmem:[#allocation2 + $0x28] sm:$0xff]
    %v69 = vld [vmem:[#allocation2 + $0x30] sm:$0xff]
    %v70 = vld [vmem:[#allocation2 + $0x38] sm:$0xff]
    %v71 = vpack.c.bf16 %v67, %v63
    %v72 = vpack.c.bf16 %v68, %v64
    %v73 = vpack.c.bf16 %v69, %v65
    %v74 = vpack.c.bf16 %v70, %v66
    %v75 = vld [vmem:[#allocation5] sm:$0xf]
    %v76 = vld [vmem:[#allocation5 + $0x4] sm:$0xf]
    %v77 = vld [vmem:[#allocation5 + $0x8] sm:$0xf]
    %v78 = vld [vmem:[#allocation5 + $0xc] sm:$0xf]
    %v79 = vld [vmem:[#allocation5 + $0x10] sm:$0xf]
    %v80 = vld [vmem:[#allocation5 + $0x14] sm:$0xf]
    %v81 = vld [vmem:[#allocation5 + $0x18] sm:$0xf]
    %v82 = vld [vmem:[#allocation5 + $0x1c] sm:$0xf]
    %v83 = vld [vmem:[#allocation5 + $0x20] sm:$0xf]
    %v84 = vld [vmem:[#allocation5 + $0x24] sm:$0xf]
    %v85 = vld [vmem:[#allocation5 + $0x28] sm:$0xf]
    %v86 = vld [vmem:[#allocation5 + $0x2c] sm:$0xf]
    %v87 = vld [vmem:[#allocation5 + $0x30] sm:$0xf]
    %v88 = vld [vmem:[#allocation5 + $0x34] sm:$0xf]
    %v89 = vld [vmem:[#allocation5 + $0x38] sm:$0xf]
    %v90 = vld [vmem:[#allocation5 + $0x3c] sm:$0xf]
    %v91 = vld [vmem:[#allocation5 + $0x40] sm:$0xf]
    %v92 = vld [vmem:[#allocation5 + $0x44] sm:$0xf]
    %v93 = vld [vmem:[#allocation5 + $0x48] sm:$0xf]
    %v94 = vld [vmem:[#allocation5 + $0x4c] sm:$0xf]
    %v95 = vld [vmem:[#allocation5 + $0x50] sm:$0xf]
    %v96 = vld [vmem:[#allocation5 + $0x54] sm:$0xf]
    %v97 = vld [vmem:[#allocation5 + $0x58] sm:$0xf]
    %v98 = vld [vmem:[#allocation5 + $0x5c] sm:$0xf]
    %v99 = vld [vmem:[#allocation5 + $0x60] sm:$0xf]
    %v100 = vld [vmem:[#allocation5 + $0x64] sm:$0xf]
    %v101 = vld [vmem:[#allocation5 + $0x68] sm:$0xf]
    %v102 = vld [vmem:[#allocation5 + $0x6c] sm:$0xf]
    %v103 = vld [vmem:[#allocation5 + $0x70] sm:$0xf]
    %v104 = vld [vmem:[#allocation5 + $0x74] sm:$0xf]
    %v105 = vld [vmem:[#allocation5 + $0x78] sm:$0xf]
    %v106 = vld [vmem:[#allocation5 + $0x7c] sm:$0xf]
    %v107 = vld [vmem:[#allocation5 + $0x80] sm:$0xf]
    %v108 = vld [vmem:[#allocation5 + $0x84] sm:$0xf]
    %v109 = vld [vmem:[#allocation5 + $0x88] sm:$0xf]
    %v110 = vld [vmem:[#allocation5 + $0x8c] sm:$0xf]
    %v111 = vld [vmem:[#allocation5 + $0x90] sm:$0xf]
    %v112 = vld [vmem:[#allocation5 + $0x94] sm:$0xf]
    %v113 = vld [vmem:[#allocation5 + $0x98] sm:$0xf]
    %v114 = vld [vmem:[#allocation5 + $0x9c] sm:$0xf]
    %v115 = vld [vmem:[#allocation5 + $0xa0] sm:$0xf]
    %v116 = vld [vmem:[#allocation5 + $0xa4] sm:$0xf]
    %v117 = vld [vmem:[#allocation5 + $0xa8] sm:$0xf]
    %v118 = vld [vmem:[#allocation5 + $0xac] sm:$0xf]
    %v119 = vld [vmem:[#allocation5 + $0xb0] sm:$0xf]
    %v120 = vld [vmem:[#allocation5 + $0xb4] sm:$0xf]
    %v121 = vld [vmem:[#allocation5 + $0xb8] sm:$0xf]
    %v122 = vld [vmem:[#allocation5 + $0xbc] sm:$0xf]
    %v123 = vld [vmem:[#allocation5 + $0xc0] sm:$0xf]
    %v124 = vld [vmem:[#allocation5 + $0xc4] sm:$0xf]
    %v125 = vld [vmem:[#allocation5 + $0xc8] sm:$0xf]
    %v126 = vld [vmem:[#allocation5 + $0xcc] sm:$0xf]
    %v127 = vld [vmem:[#allocation5 + $0xd0] sm:$0xf]
    %v128 = vld [vmem:[#allocation5 + $0xd4] sm:$0xf]
    %v129 = vld [vmem:[#allocation5 + $0xd8] sm:$0xf]
    %v130 = vld [vmem:[#allocation5 + $0xdc] sm:$0xf]
    %v131 = vld [vmem:[#allocation5 + $0xe0] sm:$0xf]
    %v132 = vld [vmem:[#allocation5 + $0xe4] sm:$0xf]
    %v133 = vld [vmem:[#allocation5 + $0xe8] sm:$0xf]
    %v134 = vld [vmem:[#allocation5 + $0xec] sm:$0xf]
    %v135 = vld [vmem:[#allocation5 + $0xf0] sm:$0xf]
    %v136 = vld [vmem:[#allocation5 + $0xf4] sm:$0xf]
    %v137 = vld [vmem:[#allocation5 + $0xf8] sm:$0xf]
    %v138 = vld [vmem:[#allocation5 + $0xfc] sm:$0xf]
    %v139 = vld [vmem:[%s2] sm:$0x1]
    %v141 = vlaneseq
    %v142 = vshrl.u32 %v141, 7
    %v143 = vsub.s32 0, %v142
    %v144 = vrot.slane %v139, %v143
    %v210 = vunpack.c.l.b16 %v75
    %v211 = vunpack.c.l.b16 %v76
    %v212 = vunpack.c.l.b16 %v77
    %v213 = vunpack.c.l.b16 %v78
    %v214 = vunpack.c.l.b16 %v79
    %v215 = vunpack.c.l.b16 %v80
    %v216 = vunpack.c.l.b16 %v81
    %v217 = vunpack.c.l.b16 %v82
    %v218 = vunpack.c.l.b16 %v83
    %v219 = vunpack.c.l.b16 %v84
    %v220 = vunpack.c.l.b16 %v85
    %v221 = vunpack.c.l.b16 %v86
    %v222 = vunpack.c.l.b16 %v87
    %v223 = vunpack.c.l.b16 %v88
    %v224 = vunpack.c.l.b16 %v89
    %v225 = vunpack.c.l.b16 %v90
    %v226 = vunpack.c.l.b16 %v91
    %v227 = vunpack.c.l.b16 %v92
    %v228 = vunpack.c.l.b16 %v93
    %v229 = vunpack.c.l.b16 %v94
    %v230 = vunpack.c.l.b16 %v95
    %v231 = vunpack.c.l.b16 %v96
    %v232 = vunpack.c.l.b16 %v97
    %v233 = vunpack.c.l.b16 %v98
    %v234 = vunpack.c.l.b16 %v99
    %v235 = vunpack.c.l.b16 %v100
    %v236 = vunpack.c.l.b16 %v101
    %v237 = vunpack.c.l.b16 %v102
    %v238 = vunpack.c.l.b16 %v103
    %v239 = vunpack.c.l.b16 %v104
    %v240 = vunpack.c.l.b16 %v105
    %v241 = vunpack.c.l.b16 %v106
    %v242 = vunpack.c.l.b16 %v107
    %v243 = vunpack.c.l.b16 %v108
    %v244 = vunpack.c.l.b16 %v109
    %v245 = vunpack.c.l.b16 %v110
    %v246 = vunpack.c.l.b16 %v111
    %v247 = vunpack.c.l.b16 %v112
    %v248 = vunpack.c.l.b16 %v113
    %v249 = vunpack.c.l.b16 %v114
    %v250 = vunpack.c.l.b16 %v115
    %v251 = vunpack.c.l.b16 %v116
    %v252 = vunpack.c.l.b16 %v117
    %v253 = vunpack.c.l.b16 %v118
    %v254 = vunpack.c.l.b16 %v119
    %v255 = vunpack.c.l.b16 %v120
    %v256 = vunpack.c.l.b16 %v121
    %v257 = vunpack.c.l.b16 %v122
    %v258 = vunpack.c.l.b16 %v123
    %v259 = vunpack.c.l.b16 %v124
    %v260 = vunpack.c.l.b16 %v125
    %v261 = vunpack.c.l.b16 %v126
    %v262 = vunpack.c.l.b16 %v127
    %v263 = vunpack.c.l.b16 %v128
    %v264 = vunpack.c.l.b16 %v129
    %v265 = vunpack.c.l.b16 %v130
    %v266 = vunpack.c.l.b16 %v131
    %v267 = vunpack.c.l.b16 %v132
    %v268 = vunpack.c.l.b16 %v133
    %v269 = vunpack.c.l.b16 %v134
    %v270 = vunpack.c.l.b16 %v135
    %v271 = vunpack.c.l.b16 %v136
    %v272 = vunpack.c.l.b16 %v137
    %v273 = vunpack.c.l.b16 %v138
    %v274 = vpack.c.b16 %v211, %v210
    %v275 = vpack.c.b16 %v213, %v212
    %v276 = vpack.c.b16 %v215, %v214
    %v277 = vpack.c.b16 %v217, %v216
    %v278 = vpack.c.b16 %v219, %v218
    %v279 = vpack.c.b16 %v221, %v220
    %v280 = vpack.c.b16 %v223, %v222
    %v281 = vpack.c.b16 %v225, %v224
    %v282 = vpack.c.b16 %v227, %v226
    %v283 = vpack.c.b16 %v229, %v228
    %v284 = vpack.c.b16 %v231, %v230
    %v285 = vpack.c.b16 %v233, %v232
    %v286 = vpack.c.b16 %v235, %v234
    %v287 = vpack.c.b16 %v237, %v236
    %v288 = vpack.c.b16 %v239, %v238
    %v289 = vpack.c.b16 %v241, %v240
    %v290 = vpack.c.b16 %v243, %v242
    %v291 = vpack.c.b16 %v245, %v244
    %v292 = vpack.c.b16 %v247, %v246
    %v293 = vpack.c.b16 %v249, %v248
    %v294 = vpack.c.b16 %v251, %v250
    %v295 = vpack.c.b16 %v253, %v252
    %v296 = vpack.c.b16 %v255, %v254
    %v297 = vpack.c.b16 %v257, %v256
    %v298 = vpack.c.b16 %v259, %v258
    %v299 = vpack.c.b16 %v261, %v260
    %v300 = vpack.c.b16 %v263, %v262
    %v301 = vpack.c.b16 %v265, %v264
    %v302 = vpack.c.b16 %v267, %v266
    %v303 = vpack.c.b16 %v269, %v268
    %v304 = vpack.c.b16 %v271, %v270
    %v305 = vpack.c.b16 %v273, %v272
    %338 = vmatprep.subr.bf16.mxu0 0
    %339 = vmatpush1.bf16.msra.mxu0 %v274
    %340 = vmatprep.subr.bf16.mxu0 0
    %341 = vmatpush1.bf16.msra.mxu0 %v275
    %342 = vmatprep.subr.bf16.mxu0 0
    %343 = vmatpush1.bf16.msra.mxu0 %v276
    %344 = vmatprep.subr.bf16.mxu0 0
    %345 = vmatpush1.bf16.msra.mxu0 %v277
    %346 = vmatprep.subr.bf16.mxu0 0
    %347 = vmatpush1.bf16.msra.mxu0 %v278
    %348 = vmatprep.subr.bf16.mxu0 0
    %349 = vmatpush1.bf16.msra.mxu0 %v279
    %350 = vmatprep.subr.bf16.mxu0 0
    %351 = vmatpush1.bf16.msra.mxu0 %v280
    %352 = vmatprep.subr.bf16.mxu0 0
    %353 = vmatpush1.bf16.msra.mxu0 %v281
    %354 = vmatprep.subr.bf16.mxu0 0
    %355 = vmatpush1.bf16.msra.mxu0 %v282
    %356 = vmatprep.subr.bf16.mxu0 0
    %357 = vmatpush1.bf16.msra.mxu0 %v283
    %358 = vmatprep.subr.bf16.mxu0 0
    %359 = vmatpush1.bf16.msra.mxu0 %v284
    %360 = vmatprep.subr.bf16.mxu0 0
    %361 = vmatpush1.bf16.msra.mxu0 %v285
    %362 = vmatprep.subr.bf16.mxu0 0
    %363 = vmatpush1.bf16.msra.mxu0 %v286
    %364 = vmatprep.subr.bf16.mxu0 0
    %365 = vmatpush1.bf16.msra.mxu0 %v287
    %366 = vmatprep.subr.bf16.mxu0 0
    %367 = vmatpush1.bf16.msra.mxu0 %v288
    %368 = vmatprep.subr.bf16.mxu0 0
    %369 = vmatpush1.bf16.msra.mxu0 %v289
    %370 = vmatprep.mubr.bf16.mxu0 %v72
    %371 = vmatmul.mubr.bf16.gmra.mrb[0].mxu0 %v71
    %v372 = vpop.f32.mrb[0].mxu0
    %v373 = vadd.f32 %v144, %v372
    %v374 = vpop.f32.mrb[0].mxu0
    %v375 = vpop.f32.mrb[0].mxu0
    %v376 = vadd.f32 %v144, %v375
    %v377 = vpop.f32.mrb[0].mxu0
    %378 = vdwg.mxu0
    %379 = vmatprep.subr.bf16.mxu0 0
    %380 = vmatpush1.bf16.msra.mxu0 %v290
    %381 = vmatprep.subr.bf16.mxu0 0
    %382 = vmatpush1.bf16.msra.mxu0 %v291
    %383 = vmatprep.subr.bf16.mxu0 0
    %384 = vmatpush1.bf16.msra.mxu0 %v292
    %385 = vmatprep.subr.bf16.mxu0 0
    %386 = vmatpush1.bf16.msra.mxu0 %v293
    %387 = vmatprep.subr.bf16.mxu0 0
    %388 = vmatpush1.bf16.msra.mxu0 %v294
    %389 = vmatprep.subr.bf16.mxu0 0
    %390 = vmatpush1.bf16.msra.mxu0 %v295
    %391 = vmatprep.subr.bf16.mxu0 0
    %392 = vmatpush1.bf16.msra.mxu0 %v296
    %393 = vmatprep.subr.bf16.mxu0 0
    %394 = vmatpush1.bf16.msra.mxu0 %v297
    %395 = vmatprep.subr.bf16.mxu0 0
    %396 = vmatpush1.bf16.msra.mxu0 %v298
    %397 = vmatprep.subr.bf16.mxu0 0
    %398 = vmatpush1.bf16.msra.mxu0 %v299
    %399 = vmatprep.subr.bf16.mxu0 0
    %400 = vmatpush1.bf16.msra.mxu0 %v300
    %401 = vmatprep.subr.bf16.mxu0 0
    %402 = vmatpush1.bf16.msra.mxu0 %v301
    %403 = vmatprep.subr.bf16.mxu0 0
    %404 = vmatpush1.bf16.msra.mxu0 %v302
    %405 = vmatprep.subr.bf16.mxu0 0
    %406 = vmatpush1.bf16.msra.mxu0 %v303
    %407 = vmatprep.subr.bf16.mxu0 0
    %408 = vmatpush1.bf16.msra.mxu0 %v304
    %409 = vmatprep.subr.bf16.mxu0 0
    %410 = vmatpush1.bf16.msra.mxu0 %v305
    %411 = vmatprep.mubr.bf16.mxu0 %v74
    %412 = vmatmul.mubr.bf16.gmra.mrb[0].mxu0 %v73
    %v413 = vpop.f32.mrb[0].mxu0
    %v414 = vadd.f32 %v373, %v413
    %v415 = vpop.f32.mrb[0].mxu0
    %v416 = vpop.f32.mrb[0].mxu0
    %v417 = vadd.f32 %v376, %v416
    %v418 = vpop.f32.mrb[0].mxu0
    %419 = vdwg.mxu0
    %v420 = vpack.c.bf16 %v417, %v414
    %v422 = vunpack.c.l.b16 %v420
    %v423 = vunpack.c.h.b16 %v420
    %v424 = vpack.c.b16 %v422, %v422
    %v425 = vpack.c.b16 %v423, %v423
    %428 = vst [vmem:[#allocation9] sm:$0xf] %v424
    %429 = vst [vmem:[#allocation9 + $0x4] sm:$0xf] %v425
    %v430 = vld [vmem:[#allocation7] sm:$0xf]
    %v431 = vld [vmem:[#allocation7 + $0x4] sm:$0xf]
    %v432 = vld [vmem:[#allocation7 + $0x8] sm:$0xf]
    %v433 = vld [vmem:[#allocation7 + $0xc] sm:$0xf]
    %v434 = vld [vmem:[#allocation7 + $0x10] sm:$0xf]
    %v435 = vld [vmem:[#allocation7 + $0x14] sm:$0xf]
    %v436 = vld [vmem:[#allocation7 + $0x18] sm:$0xf]
    %v437 = vld [vmem:[#allocation7 + $0x1c] sm:$0xf]
    %v438 = vld [vmem:[#allocation7 + $0x20] sm:$0xf]
    %v439 = vld [vmem:[#allocation7 + $0x24] sm:$0xf]
    %v440 = vld [vmem:[#allocation7 + $0x28] sm:$0xf]
    %v441 = vld [vmem:[#allocation7 + $0x2c] sm:$0xf]
    %v442 = vld [vmem:[#allocation7 + $0x30] sm:$0xf]
    %v443 = vld [vmem:[#allocation7 + $0x34] sm:$0xf]
    %v444 = vld [vmem:[#allocation7 + $0x38] sm:$0xf]
    %v445 = vld [vmem:[#allocation7 + $0x3c] sm:$0xf]
    %v462 = vunpack.c.l.b16 %v430
    %v463 = vunpack.c.l.b16 %v431
    %v464 = vunpack.c.l.b16 %v432
    %v465 = vunpack.c.l.b16 %v433
    %v466 = vunpack.c.l.b16 %v434
    %v467 = vunpack.c.l.b16 %v435
    %v468 = vunpack.c.l.b16 %v436
    %v469 = vunpack.c.l.b16 %v437
    %v470 = vunpack.c.l.b16 %v438
    %v471 = vunpack.c.l.b16 %v439
    %v472 = vunpack.c.l.b16 %v440
    %v473 = vunpack.c.l.b16 %v441
    %v474 = vunpack.c.l.b16 %v442
    %v475 = vunpack.c.l.b16 %v443
    %v476 = vunpack.c.l.b16 %v444
    %v477 = vunpack.c.l.b16 %v445
    %v478 = vpack.c.b16 %v463, %v462
    %v479 = vpack.c.b16 %v465, %v464
    %v480 = vpack.c.b16 %v467, %v466
    %v481 = vpack.c.b16 %v469, %v468
    %v482 = vpack.c.b16 %v471, %v470
    %v483 = vpack.c.b16 %v473, %v472
    %v484 = vpack.c.b16 %v475, %v474
    %v485 = vpack.c.b16 %v477, %v476
    %494 = vmatprep.subr.bf16.mxu0 0
    %495 = vmatpush1.bf16.msra.mxu0 %v478
    %496 = vmatprep.subr.bf16.mxu0 0
    %497 = vmatpush1.bf16.msra.mxu0 %v479
    %498 = vmatprep.subr.bf16.mxu0 0
    %499 = vmatpush1.bf16.msra.mxu0 %v480
    %500 = vmatprep.subr.bf16.mxu0 0
    %501 = vmatpush1.bf16.msra.mxu0 %v481
    %502 = vmatprep.subr.bf16.mxu0 0
    %503 = vmatpush1.bf16.msra.mxu0 %v482
    %504 = vmatprep.subr.bf16.mxu0 0
    %505 = vmatpush1.bf16.msra.mxu0 %v483
    %506 = vmatprep.subr.bf16.mxu0 0
    %507 = vmatpush1.bf16.msra.mxu0 %v484
    %508 = vmatprep.subr.bf16.mxu0 0
    %509 = vmatpush1.bf16.msra.mxu0 %v485
    %510 = vmatprep.subr.bf16.mxu0 0
    %511 = vmatpush1.bf16.msra.mxu0 0
    %512 = vmatprep.subr.bf16.mxu0 0
    %513 = vmatpush1.bf16.msra.mxu0 0
    %514 = vmatprep.subr.bf16.mxu0 0
    %515 = vmatpush1.bf16.msra.mxu0 0
    %516 = vmatprep.subr.bf16.mxu0 0
    %517 = vmatpush1.bf16.msra.mxu0 0
    %518 = vmatprep.subr.bf16.mxu0 0
    %519 = vmatpush1.bf16.msra.mxu0 0
    %520 = vmatprep.subr.bf16.mxu0 0
    %521 = vmatpush1.bf16.msra.mxu0 0
    %522 = vmatprep.subr.bf16.mxu0 0
    %523 = vmatpush1.bf16.msra.mxu0 0
    %524 = vmatprep.subr.bf16.mxu0 0
    %525 = vmatpush1.bf16.msra.mxu0 0
    %526 = vmatprep.mubr.bf16.mxu0 0
    %527 = vmatmul.mubr.bf16.gmra.mrb[0].mxu0 %v420
    %v528 = vpop.f32.mrb[0].mxu0
    %v529 = vadd.f32 0.0, %v528
    %v530 = vpop.f32.mrb[0].mxu0
    %v531 = vpop.f32.mrb[0].mxu0
    %v532 = vadd.f32 0.0, %v531
    %v533 = vpop.f32.mrb[0].mxu0
    %534 = vdwg.mxu0
    %v535 = vpack.c.bf16 %v532, %v529
    %v537 = vunpack.c.l.b16 %v535
    %v538 = vunpack.c.h.b16 %v535
    %v539 = vpack.c.b16 %v537, %v537
    %v540 = vpack.c.b16 %v538, %v538
    %543 = vst [vmem:[#allocation8] sm:$0xf] %v539
    %544 = vst [vmem:[#allocation8 + $0x4] sm:$0xf] %v540
    // Predicated region
    $region30: #{tpu_custom_call.1} parent=1 // pred_check
      _
    $region31: #{tpu_custom_call.1} parent=1 // pred_check_branch
      %546 = sbr.rel (0) target = $region33
    $region32: #{tpu_custom_call.1} parent=1 // pred_region
      %s548 = ssub.s32 128, 64
      %549 = vsyncadd [#allocation4], %s548
      %s550 = sshll.u32 [#allocation8], 4
      %s551 = int_to_ptr.vmem [resolvable:$true] %s550
      %556 = dma.vmem_to_hbm [thread:$0]  %s551, 64, %s4, [#allocation4], 64, 64, 4
    $region33: #{tpu_custom_call.1} parent=1 // pred_fallthru
      _
    // Predicated region
    $region34: #{tpu_custom_call.1} parent=1 // pred_check
      _
    $region35: #{tpu_custom_call.1} parent=1 // pred_check_branch
      %558 = sbr.rel (0) target = $region37
    $region36: #{tpu_custom_call.1} parent=1 // pred_region
      %s560 = ssub.s32 128, 64
      %561 = vsyncadd [#allocation10], %s560
      %s562 = sshll.u32 [#allocation9], 4
      %s563 = int_to_ptr.vmem [resolvable:$true] %s562
      %568 = dma.vmem_to_hbm [thread:$0]  %s563, 64, %s5, [#allocation10], 64, 64, 4
    $region37: #{tpu_custom_call.1} parent=1 // pred_fallthru
      _
    // Predicated region
    $region38: #{tpu_custom_call.1} parent=1 // pred_check
      _
    $region39: #{tpu_custom_call.1} parent=1 // pred_check_branch
      %570 = sbr.rel (0) target = $region41
    $region40: #{tpu_custom_call.1} parent=1 // pred_region
      %571 = dma.done [#allocation4], 128
    $region41: #{tpu_custom_call.1} parent=1 // pred_fallthru
      _
    // Predicated region
    $region42: #{tpu_custom_call.1} parent=1 // pred_check
      _
    $region43: #{tpu_custom_call.1} parent=1 // pred_check_branch
      %573 = sbr.rel (0) target = $region45
    $region44: #{tpu_custom_call.1} parent=1 // pred_region
      %574 = dma.done [#allocation10], 128
    $region45: #{tpu_custom_call.1} parent=1 // pred_fallthru
      _
    %575 = vsyncpa [#allocation3], 1
    %576 = vsyncpa [#allocation6], 1
    %577 = vsyncpa [#allocation4], 1
    %578 = vsyncpa [#allocation10], 1

</llo_original>
